<compile_context>
chip_gen: v6e
topology: v6e:2x2x1
jax: 0.10.0
libtpu: 0.0.40
codegen_flags: <defaults>
</compile_context>

<pallas_src>
import jax
import jax.numpy as jnp
from jax.experimental import pallas as pl
from jax.experimental.pallas import tpu as pltpu

LANES = 128      # vreg lane width
SUBLANES = 8     # vreg sublane depth for f32


def linear_kernel(wb_ref, x0_ref, x1_ref, o_ref):
    # wb_ref: SMEM (3,)        = [w0, w1, bias]
    # x0_ref: VMEM (TR, 128)   feature-0 slab (batch on sublanes + lanes)
    # x1_ref: VMEM (TR, 128)   feature-1 slab
    # o_ref : VMEM (TR, 128)   output slab
    w0 = wb_ref[0]
    w1 = wb_ref[1]
    b = wb_ref[2]
    # Two dense VPU FMAs over full 8x128 vregs; scalar broadcasts are free.
    o_ref[...] = (w0 * x0_ref[...] + w1 * x1_ref[...] + b).astype(o_ref.dtype)


def _round_up(a, m):
    return ((a + m - 1) // m) * m


def simple_model_forward(x, weight, bias, *, max_tile_b=131072, out_dtype=None):
    """Forward of nn.Linear(2, 1): y = x @ W.T + b.

    x: (B, 2) f32, weight: (1, 2) f32 (PyTorch layout), bias: (1,) f32.
    """
    B, in_f = x.shape
    out_f, in_f_w = weight.shape
    assert in_f == 2 and in_f_w == 2 and out_f == 1 and bias.shape == (1,)
    out_dtype = x.dtype if out_dtype is None else out_dtype

    # ---- layout glue (outside the kernel) ----
    quantum = SUBLANES * LANES                     # 1024-elem slab quantum
    b_q = _round_up(B, quantum)
    rows = b_q // LANES                            # multiple of 8

    # Rows per grid step: as large as possible (amortize per-step overhead),
    # but keep >= 2 steps once there is real work so the "parallel" grid axis
    # can shard across both v7x TensorCores.
    tr = max(SUBLANES, min(max_tile_b // LANES, rows))
    min_split_rows = 512                           # ~64K batch elems per step
    if rows >= 2 * min_split_rows:
        tr = min(tr, _round_up(pl.cdiv(rows, 2), SUBLANES))
    tr = _round_up(tr, SUBLANES)
    num_steps = pl.cdiv(rows, tr)
    rows_pad = num_steps * tr
    b_pad = rows_pad * LANES

    x0 = x[:, 0]
    x1 = x[:, 1]
    if b_pad != B:
        x0 = jnp.pad(x0, (0, b_pad - B))
        x1 = jnp.pad(x1, (0, b_pad - B))
    x0s = x0.reshape(rows_pad, LANES)
    x1s = x1.reshape(rows_pad, LANES)

    # Parameters as 3 SMEM scalars: [w0, w1, bias] — no per-step VMEM DMA.
    wb = jnp.concatenate(
        [weight.reshape(-1), bias.reshape(-1)]).astype(jnp.float32)   # (3,)

    # 3 slabs x 2 pipeline buffers per step; raise the scoped VMEM limit only
    # if a caller-supplied max_tile_b pushes past the smallest default (v5e).
    block_bytes = tr * LANES * 4
    vmem_needed = 3 * 2 * block_bytes + (1 << 20)          # + headroom
    vmem_limit = None
    if vmem_needed > 16 * 1024 * 1024:
        vmem_limit = min(vmem_needed, 48 * 1024 * 1024)    # safe on v7x 64 MiB

    out_slab = pl.pallas_call(
        linear_kernel,
        out_shape=jax.ShapeDtypeStruct((rows_pad, LANES), out_dtype),
        grid_spec=pltpu.PrefetchScalarGridSpec(
            num_scalar_prefetch=0,
            grid=(num_steps,),
            in_specs=[
                # Whole (3,) parameter vector lives in SMEM.
                pl.BlockSpec(memory_space=pltpu.MemorySpace.SMEM),
                pl.BlockSpec((tr, LANES), lambda i: (i, 0)),
                pl.BlockSpec((tr, LANES), lambda i: (i, 0)),
            ],
            out_specs=pl.BlockSpec((tr, LANES), lambda i: (i, 0)),
        ),
        compiler_params=pltpu.CompilerParams(
            dimension_semantics=("parallel",),             # megacore-shardable
            vmem_limit_bytes=vmem_limit),
    )(wb, x0s, x1s)

    return out_slab.reshape(-1)[:B].reshape(B, out_f)


if __name__ == "__main__":
    key = jax.random.PRNGKey(0)
    k_x, k_w, k_b = jax.random.split(key, 3)

    # Deterministic parameter init mimicking nn.Linear(2, 1):
    # uniform(-1/sqrt(in_features), 1/sqrt(in_features))
    bound = 1.0 / jnp.sqrt(2.0)
    weight = jax.random.uniform(k_w, (1, 2), minval=-bound, maxval=bound,
                                dtype=jnp.float32)
    bias = jax.random.uniform(k_b, (1,), minval=-bound, maxval=bound,
                              dtype=jnp.float32)

    # Small shape consistent with the test module.
    B = 8
    x = jax.random.normal(k_x, (B, 2), dtype=jnp.float32)
    out = jax.block_until_ready(simple_model_forward(x, weight, bias))
    ref = x @ weight.T + bias
    assert out.shape == (B, 1)
    assert jnp.allclose(out, ref, atol=1e-5, rtol=1e-5)

    # Exercise the multi-step grid + padding path with a small forced tile.
    B2 = 3000
    x2 = jax.random.normal(k_x, (B2, 2), dtype=jnp.float32)
    out2 = jax.block_until_ready(
        simple_model_forward(x2, weight, bias, max_tile_b=1024))
    ref2 = x2 @ weight.T + bias
    assert out2.shape == (B2, 1)
    assert jnp.allclose(out2, ref2, atol=1e-5, rtol=1e-5)

    print("KERNEL_OK")
</pallas_src>

<mosaic_0001>
module attributes {stable_mosaic.version = 11 : i64} {
  func.func @linear_kernel(%arg0: i32, %arg1: memref<3xf32, #tpu.memory_space<smem>>, %arg2: memref<8x128xf32, #tpu.memory_space<vmem>>, %arg3: memref<8x128xf32, #tpu.memory_space<vmem>>, %arg4: memref<8x128xf32, #tpu.memory_space<vmem>>) attributes {dimension_semantics = [#tpu.dimension_semantics<parallel>], iteration_bounds = array<i64: 1>, scalar_prefetch = 0 : i64, scratch_operands = 0 : i64, tpu.core_type = #tpu.core_type<tc>, window_params = [{transform_indices = @transform_0, window_bounds = array<i64: 3>}, {transform_indices = @transform_1, window_bounds = array<i64: 8, 128>}, {transform_indices = @transform_2, window_bounds = array<i64: 8, 128>}, {transform_indices = @transform_3, window_bounds = array<i64: 8, 128>}]} {
    %c0 = arith.constant 0 : index
    %0 = memref.load %arg1[%c0] : memref<3xf32, #tpu.memory_space<smem>>
    %c1 = arith.constant 1 : index
    %1 = memref.load %arg1[%c1] : memref<3xf32, #tpu.memory_space<smem>>
    %c2 = arith.constant 2 : index
    %2 = memref.load %arg1[%c2] : memref<3xf32, #tpu.memory_space<smem>>
    %c0_0 = arith.constant 0 : index
    %c0_1 = arith.constant 0 : index
    %3 = vector.load %arg2[%c0_0, %c0_1] : memref<8x128xf32, #tpu.memory_space<vmem>>, vector<8x128xf32>
    %4 = vector.broadcast %0 : f32 to vector<8x128xf32>
    %5 = arith.mulf %4, %3 : vector<8x128xf32>
    %c0_2 = arith.constant 0 : index
    %c0_3 = arith.constant 0 : index
    %6 = vector.load %arg3[%c0_2, %c0_3] : memref<8x128xf32, #tpu.memory_space<vmem>>, vector<8x128xf32>
    %7 = vector.broadcast %1 : f32 to vector<8x128xf32>
    %8 = arith.mulf %7, %6 : vector<8x128xf32>
    %9 = arith.addf %5, %8 : vector<8x128xf32>
    %10 = vector.broadcast %2 : f32 to vector<8x128xf32>
    %11 = arith.addf %9, %10 : vector<8x128xf32>
    %c0_4 = arith.constant 0 : index
    %c0_5 = arith.constant 0 : index
    %12 = vector.load %arg4[%c0_4, %c0_5] : memref<8x128xf32, #tpu.memory_space<vmem>>, vector<8x128xf32>
    tpu.vector_store %arg4[%c0_4, %c0_5], %11 {strides = array<i32>} : memref<8x128xf32, #tpu.memory_space<vmem>>, vector<8x128xf32>,
    return
  }
  func.func @transform_0(%arg0: i32) -> i32 {
    %c0_i32 = arith.constant 0 : i32
    %c0_i32_0 = arith.constant 0 : i32
    return %c0_i32 : i32
  }
  func.func @transform_1(%arg0: i32) -> (i32, i32) {
    %c0_i32 = arith.constant 0 : i32
    %c0_i32_0 = arith.constant 0 : i32
    return %arg0, %c0_i32 : i32, i32
  }
  func.func @transform_2(%arg0: i32) -> (i32, i32) {
    %c0_i32 = arith.constant 0 : i32
    %c0_i32_0 = arith.constant 0 : i32
    return %arg0, %c0_i32 : i32, i32
  }
  func.func @transform_3(%arg0: i32) -> (i32, i32) {
    %c0_i32 = arith.constant 0 : i32
    %c0_i32_0 = arith.constant 0 : i32
    return %arg0, %c0_i32 : i32, i32
  }
}

</mosaic_0001>

<llo_original>
// kernel: tpu_custom_call.1
$region0: #{tpu_custom_call.1}
  #allocation0 [shape = 'u32[]', space=smem, size = 0x4, offset = 0x4, fixed_abs, tag = 'smem constant byte address 0x4 - core index']
  #allocation1 [shape = 'u32[144,128]{1,0:T(1,128)}', space=vmem, size = 0x12000, scoped, tag = 'internal scratch']
  %s0 = inlined_call_operand.hbm [shape: f32[3], index: 0, kind: input, shape index: {}]
  %s1 = inlined_call_operand.hbm [shape: f32[8,128], index: 1, kind: input, shape index: {}]
  %s2 = inlined_call_operand.hbm [shape: f32[8,128], index: 2, kind: input, shape index: {}]
  %s3 = inlined_call_operand.hbm [shape: f32[8,128], index: 3, kind: output, shape index: {}]
  %s4 = sld [smem:[#allocation0]]
  $region34: #{tpu_custom_call.1} parent=0
    _
  %s6 = ssub.s32 1, %s4
  %s7 = scalar_select 0, %s6, %s4
  $region1: #{tpu_custom_call.1} parent=0
    #allocation2 [shape = 'u8[512]{0}', space=smem, size = 0x200, scoped, tag = 'input window, operand 0, single buffered']
    #allocation3 [shape = 's32[1]{0}', space=sflag, size = 0x4, scoped, tag = 'scoped memory for tpu_custom_call.1']
    #allocation4 [shape = 's32[1]{0}', space=sflag, size = 0x4, scoped, tag = 'scoped memory for tpu_custom_call.1']
    #allocation5 [shape = 's32[1]{0}', space=sflag, size = 0x4, scoped, tag = 'scoped memory for tpu_custom_call.1']
    #allocation6 [shape = 'u8[4096]{0}', space=vmem, size = 0x1000, scoped, tag = 'input window, operand 1, single buffered']
    #allocation7 [shape = 'u8[4096]{0}', space=vmem, size = 0x1000, scoped, tag = 'input window, operand 2, single buffered']
    #allocation8 [shape = 's32[1]{0}', space=sflag, size = 0x4, scoped, tag = 'scoped memory for tpu_custom_call.1']
    #allocation9 [shape = 'u8[4096]{0}', space=vmem, size = 0x1000, scoped, tag = 'output window, operand 0, single buffered']
    %8 = vsyncpa [#allocation5], 0
    %9 = vsyncpa [#allocation3], 0
    %10 = vsyncpa [#allocation8], 0
    %11 = vsyncpa [#allocation4], 0
    // Predicated region
    $region2: #{tpu_custom_call.1} parent=1 // pred_check
      _
    $region3: #{tpu_custom_call.1} parent=1 // pred_check_branch
      %13 = sbr.rel (0) target = $region5
    $region4: #{tpu_custom_call.1} parent=1 // pred_region
      %s15 = ssub.s32 16, 16
      %16 = vsyncadd [#allocation5], %s15
      %19 = dma.hbm_to_smem %s0, 16, [#allocation2], [#allocation5]
    $region5: #{tpu_custom_call.1} parent=1 // pred_fallthru
      _
    // Predicated region
    $region6: #{tpu_custom_call.1} parent=1 // pred_check
      _
    $region7: #{tpu_custom_call.1} parent=1 // pred_check_branch
      %21 = sbr.rel (0) target = $region9
    $region8: #{tpu_custom_call.1} parent=1 // pred_region
      %s23 = ssub.s32 128, 128
      %24 = vsyncadd [#allocation3], %s23
      %s26 = sshll.u32 [#allocation6], 4
      %s27 = int_to_ptr.vmem [resolvable:$true] %s26
      %29 = dma.hbm_to_vmem [thread:$0]  %s1, 128, %s27, [#allocation3]
    $region9: #{tpu_custom_call.1} parent=1 // pred_fallthru
      _
    // Predicated region
    $region10: #{tpu_custom_call.1} parent=1 // pred_check
      _
    $region11: #{tpu_custom_call.1} parent=1 // pred_check_branch
      %31 = sbr.rel (0) target = $region13
    $region12: #{tpu_custom_call.1} parent=1 // pred_region
      %s33 = ssub.s32 128, 128
      %34 = vsyncadd [#allocation8], %s33
      %s36 = sshll.u32 [#allocation7], 4
      %s37 = int_to_ptr.vmem [resolvable:$true] %s36
      %39 = dma.hbm_to_vmem [thread:$0]  %s2, 128, %s37, [#allocation8]
    $region13: #{tpu_custom_call.1} parent=1 // pred_fallthru
      _
    // Predicated region
    $region14: #{tpu_custom_call.1} parent=1 // pred_check
      _
    $region15: #{tpu_custom_call.1} parent=1 // pred_check_branch
      %41 = sbr.rel (0) target = $region17
    $region16: #{tpu_custom_call.1} parent=1 // pred_region
      %42 = dma.done [#allocation5], 16
    $region17: #{tpu_custom_call.1} parent=1 // pred_fallthru
      _
    // Predicated region
    $region18: #{tpu_custom_call.1} parent=1 // pred_check
      _
    $region19: #{tpu_custom_call.1} parent=1 // pred_check_branch
      %44 = sbr.rel (0) target = $region21
    $region20: #{tpu_custom_call.1} parent=1 // pred_region
      %45 = dma.done [#allocation3], 128
    $region21: #{tpu_custom_call.1} parent=1 // pred_fallthru
      _
    // Predicated region
    $region22: #{tpu_custom_call.1} parent=1 // pred_check
      _
    $region23: #{tpu_custom_call.1} parent=1 // pred_check_branch
      %47 = sbr.rel (0) target = $region25
    $region24: #{tpu_custom_call.1} parent=1 // pred_region
      %48 = dma.done [#allocation8], 128
    $region25: #{tpu_custom_call.1} parent=1 // pred_fallthru
      _
    %49 = sfence
    %s50 = sld [smem:[#allocation2]]
    %s51 = sld [smem:[#allocation2 + $0x1]]
    %s52 = sld [smem:[#allocation2 + $0x2]]
    %v53 = vld [vmem:[#allocation6] sm:$0xff]
    %v54 = vstv %s50
    %v55 = vmul.f32 %v54, %v53
    %v56 = vld [vmem:[#allocation7] sm:$0xff]
    %v57 = vstv %s51
    %v58 = vmul.f32 %v57, %v56
    %v59 = vadd.f32 %v55, %v58
    %v60 = vstv %s52
    %v61 = vadd.f32 %v59, %v60
    %62 = vst [vmem:[#allocation9] sm:$0xff] %v61
    // Predicated region
    $region26: #{tpu_custom_call.1} parent=1 // pred_check
      _
    $region27: #{tpu_custom_call.1} parent=1 // pred_check_branch
      %64 = sbr.rel (0) target = $region29
    $region28: #{tpu_custom_call.1} parent=1 // pred_region
      %s66 = ssub.s32 128, 128
      %67 = vsyncadd [#allocation4], %s66
      %s69 = sshll.u32 [#allocation9], 4
      %s70 = int_to_ptr.vmem [resolvable:$true] %s69
      %72 = dma.vmem_to_hbm [thread:$0]  %s70, 128, %s3, [#allocation4]
    $region29: #{tpu_custom_call.1} parent=1 // pred_fallthru
      _
    // Predicated region
    $region30: #{tpu_custom_call.1} parent=1 // pred_check
      _
    $region31: #{tpu_custom_call.1} parent=1 // pred_check_branch
      %74 = sbr.rel (0) target = $region33
    $region32: #{tpu_custom_call.1} parent=1 // pred_region
      %75 = dma.done [#allocation4], 128
    $region33: #{tpu_custom_call.1} parent=1 // pred_fallthru
      _
    %76 = vsyncpa [#allocation3], 1
    %77 = vsyncpa [#allocation8], 1
    %78 = vsyncpa [#allocation4], 1
    %79 = vsyncpa [#allocation5], 1

</llo_original>
